<compile_context>
chip_gen: v7x
topology: tpu7x:2x2x1
jax: 0.10.0
libtpu: 0.0.40
codegen_flags: <defaults>
</compile_context>

<pallas_src>
import math

import jax
import jax.numpy as jnp
from jax.experimental import pallas as pl
from jax.experimental.pallas import tpu as pltpu

LOG2PI = math.log(2.0 * math.pi)


# ----------------------------- kernel -------------------------------------- #
def _make_kernel(flow_depth, reverse, log_flow_std, latent, hidden, slab_pad,
                 mxu_dtype):
    D, H, L = latent, hidden, flow_depth

    def kernel(xz_ref, w1_ref, wc_ref, b_in_ref, w_out_ref, b_out_ref,
               loc_ref, logsc_ref, out_ref):
        xz = xz_ref[...]                     # (bt, 2D) = [nu_K | z]
        nu = xz[:, :D]                       # running flow state (f32 carry)
        zc = xz[:, D:]                       # context z (frame-folded if odd L)

        # Layer-invariant context projection hoisted out of the layer loop:
        # one wide matmul (N = L*H) instead of doubling K in every layer.
        z_proj = jnp.dot(zc.astype(mxu_dtype), wc_ref[...],
                         preferred_element_type=jnp.float32)    # (bt, L*H)

        acc = jnp.zeros_like(nu)             # -sum log_s, reference alignment

        # TODO(synk): for large flow_depth, switch to lax.fori_loop over the
        # stacked weight refs (or make L an 'arbitrary' grid axis with
        # per-layer weight BlockSpecs) so only one layer's weights stay
        # resident; full unroll is best for the small L used here.
        for l in range(L):
            h = jnp.tanh(
                jnp.dot(nu.astype(mxu_dtype), w1_ref[l],
                        preferred_element_type=jnp.float32)
                + z_proj[:, l * H:(l + 1) * H] + b_in_ref[l])    # (bt, H)
            o = jnp.dot(h.astype(mxu_dtype), w_out_ref[l],
                        preferred_element_type=jnp.float32) + b_out_ref[l]
            m = o[:, :D]
            log_s = jnp.tanh(o[:, D:2 * D]) + log_flow_std      # kernel frame
            nu = (nu - m) * jnp.exp(-log_s)
            if reverse and (l % 2 == 1):
                # third weight block is the *un-reversed* ws: gives log_s in
                # the reference frame so log_r_nu accumulates exactly here
                log_s_acc = jnp.tanh(o[:, 2 * D:3 * D]) + log_flow_std
            else:
                log_s_acc = log_s
            acc = acc - log_s_acc

        # BinaryDistribution r(nu_0 | z): Gaussian log prob.  The PyTorch
        # module multiplies BOTH columns by the same (z > 0) mask and sums, so
        # mask * (loc0 + loc1) / mask * (ls0 + ls1) (pre-summed) is exact.
        mask = (zc > 0.0).astype(jnp.float32)                   # (bt, D)
        loc_eff = mask * loc_ref[...]
        logsc_eff = mask * logsc_ref[...]
        log_r0 = (-0.5 * LOG2PI - logsc_eff
                  - 0.5 * (nu - loc_eff) ** 2 * jnp.exp(-2.0 * logsc_eff))

        parts = [nu, log_r0, acc]
        if slab_pad:                          # pad slab to a 128-lane multiple
            parts.append(jnp.zeros((nu.shape[0], slab_pad), jnp.float32))
        out_ref[...] = jnp.concatenate(parts, axis=-1)          # lane-dense

    return kernel


# ------------------------ init-time parameter glue ------------------------- #
def prepare_params(params, *, flow_depth, reverse, weights_dtype=jnp.float32):
    """Fuse per-layer matmuls and fold flow.Reverse into the weights.

    weights_dtype=bfloat16 ships bf16 MXU operands (f32 accumulation stays in
    the kernel) and halves weight DMA / resident VMEM (v6e / v7x path).
    """
    D = params["w1"].shape[1]
    H = params["w1"].shape[2]
    odd = bool(reverse) and (flow_depth % 2 == 1)

    w1_l, wc_l, b1_l, wout_l, bout_l = [], [], [], [], []
    for l in range(flow_depth):
        w1 = params["w1"][l]          # (D, H)
        wc = params["wc"][l]          # (D, H)
        wm = params["wm"][l]          # (H, D)
        ws = params["ws"][l]          # (H, D)
        bm = params["bm"][l]          # (1, D)
        bs = params["bs"][l]          # (1, D)
        ws_raw, bs_raw = ws, bs
        if reverse and (l % 2 == 1):
            # State entering layer l was reversed an odd number of times in
            # the reference; fold that reversal into the weights (zero cost).
            w1 = w1[::-1, :]
            wm = wm[:, ::-1]
            ws = ws[:, ::-1]
            bm = bm[:, ::-1]
            bs = bs[:, ::-1]
        w1_l.append(w1)
        wc_l.append(wc)
        b1_l.append(params["b1"][l])                              # (1, H)
        if reverse:
            # [m | log_s (kernel frame) | log_s (reference frame)]
            wout_l.append(jnp.concatenate([wm, ws, ws_raw], axis=1))  # (H, 3D)
            bout_l.append(jnp.concatenate([bm, bs, bs_raw], axis=1))  # (1, 3D)
        else:
            wout_l.append(jnp.concatenate([wm, ws], axis=1))          # (H, 2D)
            bout_l.append(jnp.concatenate([bm, bs], axis=1))          # (1, 2D)

    wc_all = jnp.concatenate(wc_l, axis=1)                        # (D, L*H)
    loc_sum = (params["loc"][:, 0] + params["loc"][:, 1])[None, :]        # (1,D)
    logsc_sum = (params["log_scale"][:, 0]
                 + params["log_scale"][:, 1])[None, :]                    # (1,D)
    if odd:
        # Final frame is reversed: pre-reverse the base-dist params and the
        # context rows (the wrapper feeds reversed z, so z @ wc is unchanged).
        wc_all = wc_all[::-1, :]
        loc_sum = loc_sum[:, ::-1]
        logsc_sum = logsc_sum[:, ::-1]

    wd = weights_dtype
    return dict(w1=jnp.stack(w1_l).astype(wd),            # (L, D, H)
                wc_all=wc_all.astype(wd),                 # (D, L*H)
                b_in=jnp.stack(b1_l),                     # (L, 1, H)  f32
                w_out=jnp.stack(wout_l).astype(wd),       # (L, H, 2D|3D)
                b_out=jnp.stack(bout_l),                  # (L, 1, 2D|3D) f32
                loc_sum=loc_sum, logsc_sum=logsc_sum,     # (1, D)  f32
                flow_depth=flow_depth, reverse=bool(reverse), odd=odd,
                latent=D, hidden=H, mxu_dtype=wd)


# ------------------------------- wrapper ------------------------------------ #
def _pick_block_b(batch, block_b, min_grid_steps):
    """Large batch tiles (>=512 preferred), multiple of 8, but keep >= 2 grid
    steps when the batch allows it so v7x megacore can shard the grid."""
    if batch <= 8:
        return batch
    bt = min(block_b, batch)
    if min_grid_steps > 1:
        bt = min(bt, max(8, batch // min_grid_steps))
    return max(8, (bt // 8) * 8)


def binary_conditional_posterior(nu_K, z, prep, *, flow_std,
                                 block_b=512, min_grid_steps=2):
    B, D = nu_K.shape
    L, H = prep["flow_depth"], prep["hidden"]
    odd = prep["odd"]

    # Fold the residual odd-depth Reverse into the input: context rows of wc
    # were pre-reversed to compensate, so z @ wc is unchanged while the
    # in-kernel base-dist mask lands in the (reversed) output frame.
    z_in = z[:, ::-1] if odd else z
    xz = jnp.concatenate([nu_K, z_in], axis=-1)          # (B, 2D) single stream

    slab_w = 3 * D
    slab_pad = (-slab_w) % 128                           # keep stores lane-dense
    slab_w += slab_pad

    bt = _pick_block_b(B, block_b, min_grid_steps)
    grid = (pl.cdiv(B, bt),)

    kernel = _make_kernel(L, prep["reverse"], math.log(flow_std), D, H,
                          slab_pad, prep["mxu_dtype"])

    def const_spec(a):
        nd = a.ndim
        # Grid-invariant: constant index map, DMA'd once and kept resident.
        return pl.BlockSpec(a.shape, lambda i, _nd=nd: (0,) * _nd)

    consts = (prep["w1"], prep["wc_all"], prep["b_in"], prep["w_out"],
              prep["b_out"], prep["loc_sum"], prep["logsc_sum"])

    # Explicit VMEM budget: resident weights + double-buffered in/out tiles +
    # per-layer intermediates, with headroom; clamped to be safe on v5e/v6e
    # (128 MiB physical) and v7x (64 MiB physical, 32 MiB default scoped).
    est = (sum(int(a.size) * a.dtype.itemsize for a in consts)
           + 2 * bt * (2 * D) * 4 + 2 * bt * slab_w * 4
           + bt * (L * H + H + 3 * D) * 4)
    vmem_limit = int(min(max(4 * est, 32 << 20), 48 << 20))

    slab = pl.pallas_call(
        kernel,
        out_shape=jax.ShapeDtypeStruct((B, slab_w), jnp.float32),
        grid=grid,
        in_specs=[pl.BlockSpec((bt, 2 * D), lambda i: (i, 0))]
                 + [const_spec(a) for a in consts],
        out_specs=pl.BlockSpec((bt, slab_w), lambda i: (i, 0)),
        compiler_params=pltpu.CompilerParams(
            dimension_semantics=("parallel",),
            vmem_limit_bytes=vmem_limit),
    )(xz, *consts)

    nu_0 = slab[:, 0 * D:1 * D]
    log_r_nu_0 = slab[:, 1 * D:2 * D]
    log_r_nu = slab[:, 2 * D:3 * D]       # already in reference alignment
    if odd:
        nu_0 = nu_0[:, ::-1]
        log_r_nu_0 = log_r_nu_0[:, ::-1]
    return nu_0, log_r_nu_0, log_r_nu


# --------------------------- synthetic parameters --------------------------- #
def init_params(key, D, H, L, flow_std):
    """Deterministic synthetic init mirroring the PyTorch module's shapes."""
    ks = jax.random.split(key, 9)

    # MADE degrees & masks (baked into the weights: parameter glue).
    in_deg = jnp.arange(1, D + 1)
    hid_deg = (jnp.arange(H) % (D - 1)) + 1
    mask_in = (hid_deg[None, :] >= in_deg[:, None]).astype(jnp.float32)   # (D,H)
    mask_out = (in_deg[None, :] > hid_deg[:, None]).astype(jnp.float32)   # (H,D)

    w1 = jax.random.normal(ks[0], (L, D, H), jnp.float32) / math.sqrt(D) * mask_in
    wc = jax.random.normal(ks[1], (L, D, H), jnp.float32) / math.sqrt(D)
    b1 = 0.1 * jax.random.normal(ks[2], (L, 1, H), jnp.float32)
    wm = jax.random.normal(ks[3], (L, H, D), jnp.float32) / math.sqrt(H) * mask_out
    bm = 0.1 * jax.random.normal(ks[4], (L, 1, D), jnp.float32)
    ws = jax.random.normal(ks[5], (L, H, D), jnp.float32) / math.sqrt(H) * mask_out
    bs = 0.1 * jax.random.normal(ks[6], (L, 1, D), jnp.float32)

    # BinaryDistribution.reset_parameters: gain('relu')=sqrt(2), fan_out=D.
    std = math.sqrt(2.0) / math.sqrt(D)
    loc = std * jax.random.normal(ks[7], (D, 2), jnp.float32)
    log_scale = math.log(flow_std) + std * jax.random.normal(ks[8], (D, 2),
                                                             jnp.float32)
    return dict(w1=w1, wc=wc, b1=b1, wm=wm, bm=bm, ws=ws, bs=bs,
                loc=loc, log_scale=log_scale)


# --------------------------- pure-JAX reference ----------------------------- #
def reference_forward(nu_K, z, params, *, flow_depth, flow_std, reverse,
                      mxu_dtype=jnp.float32):
    hp = jax.lax.Precision.HIGHEST
    c = math.log(flow_std)

    def dot(a, b):
        return jnp.dot(a.astype(mxu_dtype), b.astype(mxu_dtype),
                       precision=hp, preferred_element_type=jnp.float32)

    nu = nu_K
    log_r = jnp.zeros_like(nu)
    for l in range(flow_depth):
        h = jnp.tanh(dot(nu, params["w1"][l]) + dot(z, params["wc"][l])
                     + params["b1"][l])
        m = dot(h, params["wm"][l]) + params["bm"][l]
        log_s = jnp.tanh(dot(h, params["ws"][l]) + params["bs"][l]) + c
        nu = (nu - m) * jnp.exp(-log_s)
        log_r = log_r - log_s
        if reverse:
            nu = nu[:, ::-1]
    mask = (z > 0).astype(jnp.float32)[:, :, None]            # (B, D, 1)
    loc = (params["loc"][None] * mask).sum(-1)                # mask*(loc0+loc1)
    log_scale = (params["log_scale"][None] * mask).sum(-1)
    scale = jnp.exp(log_scale)
    log_r0 = -0.5 * LOG2PI - jnp.log(scale) - 0.5 * (nu - loc) ** 2 / scale ** 2
    return nu, log_r0, log_r


# ---------------------------------- demo ------------------------------------ #
if __name__ == "__main__":
    FLOW_STD = 0.5

    def run_case(*, B, D, H, L, reverse, weights_dtype, block_b,
                 ref_mxu_dtype, atol, rtol):
        key = jax.random.PRNGKey(0)
        k_nu, k_z, k_p = jax.random.split(key, 3)
        nu_K = jax.random.normal(k_nu, (B, D), dtype=jnp.float32)
        z = jax.random.bernoulli(k_z, 0.5, (B, D)).astype(jnp.float32)
        params = init_params(k_p, D, H, L, FLOW_STD)
        prep = prepare_params(params, flow_depth=L, reverse=reverse,
                              weights_dtype=weights_dtype)
        out = binary_conditional_posterior(nu_K, z, prep, flow_std=FLOW_STD,
                                           block_b=block_b)
        jax.block_until_ready(out)
        ref = reference_forward(nu_K, z, params, flow_depth=L,
                                flow_std=FLOW_STD, reverse=reverse,
                                mxu_dtype=ref_mxu_dtype)
        for got, want in zip(out, ref):
            assert got.shape == (B, D)
            assert bool(jnp.all(jnp.isfinite(got)))
            assert jnp.allclose(got, want, atol=atol, rtol=rtol), \
                float(jnp.max(jnp.abs(got - want)))

    # 1) Main demo size, f32 weights: strict check vs HIGHEST-precision ref.
    run_case(B=8, D=32, H=64, L=2, reverse=True, weights_dtype=jnp.float32,
             block_b=512, ref_mxu_dtype=jnp.float32, atol=1e-3, rtol=1e-3)
    # 2) bf16 MXU operands / weights (v6e / v7x path).  Compared against a
    #    reference whose dot operands are also rounded to bf16 (f32 accumulate)
    #    so the check isolates kernel correctness from the caller's choice of
    #    bf16 quantization; tolerance covers rare operand-rounding-boundary
    #    flips amplified by exp(-2*log_scale) in the base log prob.
    run_case(B=8, D=32, H=64, L=2, reverse=True, weights_dtype=jnp.bfloat16,
             block_b=512, ref_mxu_dtype=jnp.bfloat16, atol=0.5, rtol=5e-2)
    # 3) Odd flow_depth with reverse=True: exercises the frame-folding path
    #    (previously untested).  Slightly wider tolerance for the extra layer.
    run_case(B=8, D=32, H=64, L=3, reverse=True, weights_dtype=jnp.float32,
             block_b=512, ref_mxu_dtype=jnp.float32, atol=2e-3, rtol=2e-3)
    # 4) reverse=False branch (2D-wide fused output weights).
    run_case(B=8, D=32, H=64, L=2, reverse=False, weights_dtype=jnp.float32,
             block_b=512, ref_mxu_dtype=jnp.float32, atol=1e-3, rtol=1e-3)
    # 5) Multi-step grid with a non-dividing batch (padded last tile) so the
    #    "parallel" batch axis really has >=2 steps (v7x megacore sharding).
    run_case(B=200, D=32, H=64, L=2, reverse=True, weights_dtype=jnp.float32,
             block_b=64, ref_mxu_dtype=jnp.float32, atol=1e-3, rtol=1e-3)

    print("KERNEL_OK")
</pallas_src>

<mosaic_0001>
module attributes {stable_mosaic.version = 11 : i64} {
  func.func @kernel(%arg0: i32, %arg1: memref<8x64xf32, #tpu.memory_space<vmem>>, %arg2: memref<2x32x64xf32, #tpu.memory_space<vmem>>, %arg3: memref<32x128xf32, #tpu.memory_space<vmem>>, %arg4: memref<2x1x64xf32, #tpu.memory_space<vmem>>, %arg5: memref<2x64x96xf32, #tpu.memory_space<vmem>>, %arg6: memref<2x1x96xf32, #tpu.memory_space<vmem>>, %arg7: memref<1x32xf32, #tpu.memory_space<vmem>>, %arg8: memref<1x32xf32, #tpu.memory_space<vmem>>, %arg9: memref<8x128xf32, #tpu.memory_space<vmem>>) attributes {dimension_semantics = [#tpu.dimension_semantics<parallel>], iteration_bounds = array<i64: 1>, scalar_prefetch = 0 : i64, scratch_operands = 0 : i64, tpu.core_type = #tpu.core_type<tc>, window_params = [{transform_indices = @transform_0, window_bounds = array<i64: 8, 64>}, {pipeline_mode = #tpu.pipeline_mode<synchronous>, transform_indices = @transform_1, window_bounds = array<i64: 2, 32, 64>}, {pipeline_mode = #tpu.pipeline_mode<synchronous>, transform_indices = @transform_2, window_bounds = array<i64: 32, 128>}, {pipeline_mode = #tpu.pipeline_mode<synchronous>, transform_indices = @transform_3, window_bounds = array<i64: 2, 1, 64>}, {pipeline_mode = #tpu.pipeline_mode<synchronous>, transform_indices = @transform_4, window_bounds = array<i64: 2, 64, 96>}, {pipeline_mode = #tpu.pipeline_mode<synchronous>, transform_indices = @transform_5, window_bounds = array<i64: 2, 1, 96>}, {pipeline_mode = #tpu.pipeline_mode<synchronous>, transform_indices = @transform_6, window_bounds = array<i64: 1, 32>}, {pipeline_mode = #tpu.pipeline_mode<synchronous>, transform_indices = @transform_7, window_bounds = array<i64: 1, 32>}, {transform_indices = @transform_8, window_bounds = array<i64: 8, 128>}]} {
    %c0 = arith.constant 0 : index
    %c0_0 = arith.constant 0 : index
    %0 = vector.load %arg1[%c0, %c0_0] : memref<8x64xf32, #tpu.memory_space<vmem>>, vector<8x64xf32>
    %1 = vector.extract_strided_slice %0 {offsets = [0, 0], sizes = [8, 32], strides = [1, 1]} : vector<8x64xf32> to vector<8x32xf32>
    %2 = vector.extract_strided_slice %0 {offsets = [0, 32], sizes = [8, 32], strides = [1, 1]} : vector<8x64xf32> to vector<8x32xf32>
    %c0_1 = arith.constant 0 : index
    %c0_2 = arith.constant 0 : index
    %3 = vector.load %arg3[%c0_1, %c0_2] : memref<32x128xf32, #tpu.memory_space<vmem>>, vector<32x128xf32>
    %cst = arith.constant dense<0.000000e+00> : vector<8x128xf32>
    %4 = tpu.matmul %2, %3, %cst {dimension_numbers = #tpu.dot_dimension_numbers<[1], [0], [0], [1], [0, 0, 1, 1], [], []>} : vector<8x32xf32>, vector<32x128xf32>, vector<8x128xf32> -> vector<8x128xf32>
    %cst_3 = arith.constant 0.000000e+00 : f32
    %5 = vector.broadcast %cst_3 : f32 to vector<8x32xf32>
    %c0_4 = arith.constant 0 : index
    %c0_5 = arith.constant 0 : index
    %c0_6 = arith.constant 0 : index
    %6 = vector.load %arg2[%c0_4, %c0_5, %c0_6] : memref<2x32x64xf32, #tpu.memory_space<vmem>>, vector<1x32x64xf32>
    %7 = vector.shape_cast %6 : vector<1x32x64xf32> to vector<32x64xf32>
    %cst_7 = arith.constant dense<0.000000e+00> : vector<8x64xf32>
    %8 = tpu.matmul %1, %7, %cst_7 {dimension_numbers = #tpu.dot_dimension_numbers<[1], [0], [0], [1], [0, 0, 1, 1], [], []>} : vector<8x32xf32>, vector<32x64xf32>, vector<8x64xf32> -> vector<8x64xf32>
    %9 = vector.extract_strided_slice %4 {offsets = [0, 0], sizes = [8, 64], strides = [1, 1]} : vector<8x128xf32> to vector<8x64xf32>
    %10 = arith.addf %8, %9 : vector<8x64xf32>
    %c0_8 = arith.constant 0 : index
    %c0_9 = arith.constant 0 : index
    %c0_10 = arith.constant 0 : index
    %11 = vector.load %arg4[%c0_8, %c0_9, %c0_10] : memref<2x1x64xf32, #tpu.memory_space<vmem>>, vector<1x1x64xf32>
    %12 = vector.shape_cast %11 : vector<1x1x64xf32> to vector<1x64xf32>
    %13 = vector.broadcast %12 : vector<1x64xf32> to vector<8x64xf32>
    %14 = arith.addf %10, %13 : vector<8x64xf32>
    %15 = math.tanh %14 : vector<8x64xf32>
    %c0_11 = arith.constant 0 : index
    %c0_12 = arith.constant 0 : index
    %c0_13 = arith.constant 0 : index
    %16 = vector.load %arg5[%c0_11, %c0_12, %c0_13] : memref<2x64x96xf32, #tpu.memory_space<vmem>>, vector<1x64x96xf32>
    %17 = vector.shape_cast %16 : vector<1x64x96xf32> to vector<64x96xf32>
    %cst_14 = arith.constant dense<0.000000e+00> : vector<8x96xf32>
    %18 = tpu.matmul %15, %17, %cst_14 {dimension_numbers = #tpu.dot_dimension_numbers<[1], [0], [0], [1], [0, 0, 1, 1], [], []>} : vector<8x64xf32>, vector<64x96xf32>, vector<8x96xf32> -> vector<8x96xf32>
    %c0_15 = arith.constant 0 : index
    %c0_16 = arith.constant 0 : index
    %c0_17 = arith.constant 0 : index
    %19 = vector.load %arg6[%c0_15, %c0_16, %c0_17] : memref<2x1x96xf32, #tpu.memory_space<vmem>>, vector<1x1x96xf32>
    %20 = vector.shape_cast %19 : vector<1x1x96xf32> to vector<1x96xf32>
    %21 = vector.broadcast %20 : vector<1x96xf32> to vector<8x96xf32>
    %22 = arith.addf %18, %21 : vector<8x96xf32>
    %23 = vector.extract_strided_slice %22 {offsets = [0, 0], sizes = [8, 32], strides = [1, 1]} : vector<8x96xf32> to vector<8x32xf32>
    %24 = vector.extract_strided_slice %22 {offsets = [0, 32], sizes = [8, 32], strides = [1, 1]} : vector<8x96xf32> to vector<8x32xf32>
    %25 = math.tanh %24 : vector<8x32xf32>
    %cst_18 = arith.constant -0.693147182 : f32
    %26 = vector.broadcast %cst_18 : f32 to vector<8x32xf32>
    %27 = arith.addf %25, %26 : vector<8x32xf32>
    %28 = arith.subf %1, %23 : vector<8x32xf32>
    %cst_19 = arith.constant 0.000000e+00 : f32
    %29 = vector.broadcast %cst_19 : f32 to vector<8x32xf32>
    %30 = arith.subf %29, %27 : vector<8x32xf32>
    %31 = math.exp %30 : vector<8x32xf32>
    %32 = arith.mulf %28, %31 : vector<8x32xf32>
    %33 = arith.subf %5, %27 : vector<8x32xf32>
    %c1 = arith.constant 1 : index
    %c0_20 = arith.constant 0 : index
    %c0_21 = arith.constant 0 : index
    %34 = vector.load %arg2[%c1, %c0_20, %c0_21] : memref<2x32x64xf32, #tpu.memory_space<vmem>>, vector<1x32x64xf32>
    %35 = vector.shape_cast %34 : vector<1x32x64xf32> to vector<32x64xf32>
    %cst_22 = arith.constant dense<0.000000e+00> : vector<8x64xf32>
    %36 = tpu.matmul %32, %35, %cst_22 {dimension_numbers = #tpu.dot_dimension_numbers<[1], [0], [0], [1], [0, 0, 1, 1], [], []>} : vector<8x32xf32>, vector<32x64xf32>, vector<8x64xf32> -> vector<8x64xf32>
    %37 = vector.extract_strided_slice %4 {offsets = [0, 64], sizes = [8, 64], strides = [1, 1]} : vector<8x128xf32> to vector<8x64xf32>
    %38 = arith.addf %36, %37 : vector<8x64xf32>
    %c1_23 = arith.constant 1 : index
    %c0_24 = arith.constant 0 : index
    %c0_25 = arith.constant 0 : index
    %39 = vector.load %arg4[%c1_23, %c0_24, %c0_25] : memref<2x1x64xf32, #tpu.memory_space<vmem>>, vector<1x1x64xf32>
    %40 = vector.shape_cast %39 : vector<1x1x64xf32> to vector<1x64xf32>
    %41 = vector.broadcast %40 : vector<1x64xf32> to vector<8x64xf32>
    %42 = arith.addf %38, %41 : vector<8x64xf32>
    %43 = math.tanh %42 : vector<8x64xf32>
    %c1_26 = arith.constant 1 : index
    %c0_27 = arith.constant 0 : index
    %c0_28 = arith.constant 0 : index
    %44 = vector.load %arg5[%c1_26, %c0_27, %c0_28] : memref<2x64x96xf32, #tpu.memory_space<vmem>>, vector<1x64x96xf32>
    %45 = vector.shape_cast %44 : vector<1x64x96xf32> to vector<64x96xf32>
    %cst_29 = arith.constant dense<0.000000e+00> : vector<8x96xf32>
    %46 = tpu.matmul %43, %45, %cst_29 {dimension_numbers = #tpu.dot_dimension_numbers<[1], [0], [0], [1], [0, 0, 1, 1], [], []>} : vector<8x64xf32>, vector<64x96xf32>, vector<8x96xf32> -> vector<8x96xf32>
    %c1_30 = arith.constant 1 : index
    %c0_31 = arith.constant 0 : index
    %c0_32 = arith.constant 0 : index
    %47 = vector.load %arg6[%c1_30, %c0_31, %c0_32] : memref<2x1x96xf32, #tpu.memory_space<vmem>>, vector<1x1x96xf32>
    %48 = vector.shape_cast %47 : vector<1x1x96xf32> to vector<1x96xf32>
    %49 = vector.broadcast %48 : vector<1x96xf32> to vector<8x96xf32>
    %50 = arith.addf %46, %49 : vector<8x96xf32>
    %51 = vector.extract_strided_slice %50 {offsets = [0, 0], sizes = [8, 32], strides = [1, 1]} : vector<8x96xf32> to vector<8x32xf32>
    %52 = vector.extract_strided_slice %50 {offsets = [0, 32], sizes = [8, 32], strides = [1, 1]} : vector<8x96xf32> to vector<8x32xf32>
    %53 = math.tanh %52 : vector<8x32xf32>
    %cst_33 = arith.constant -0.693147182 : f32
    %54 = vector.broadcast %cst_33 : f32 to vector<8x32xf32>
    %55 = arith.addf %53, %54 : vector<8x32xf32>
    %56 = arith.subf %32, %51 : vector<8x32xf32>
    %cst_34 = arith.constant 0.000000e+00 : f32
    %57 = vector.broadcast %cst_34 : f32 to vector<8x32xf32>
    %58 = arith.subf %57, %55 : vector<8x32xf32>
    %59 = math.exp %58 : vector<8x32xf32>
    %60 = arith.mulf %56, %59 : vector<8x32xf32>
    %61 = vector.extract_strided_slice %50 {offsets = [0, 64], sizes = [8, 32], strides = [1, 1]} : vector<8x96xf32> to vector<8x32xf32>
    %62 = math.tanh %61 : vector<8x32xf32>
    %cst_35 = arith.constant -0.693147182 : f32
    %63 = vector.broadcast %cst_35 : f32 to vector<8x32xf32>
    %64 = arith.addf %62, %63 : vector<8x32xf32>
    %65 = arith.subf %33, %64 : vector<8x32xf32>
    %cst_36 = arith.constant 0.000000e+00 : f32
    %66 = vector.broadcast %cst_36 : f32 to vector<8x32xf32>
    %67 = arith.cmpf ogt, %2, %66 : vector<8x32xf32>
    %68 = arith.extui %67 : vector<8x32xi1> to vector<8x32xi32>
    %69 = arith.sitofp %68 : vector<8x32xi32> to vector<8x32xf32>
    %c0_37 = arith.constant 0 : index
    %c0_38 = arith.constant 0 : index
    %70 = vector.load %arg7[%c0_37, %c0_38] : memref<1x32xf32, #tpu.memory_space<vmem>>, vector<1x32xf32>
    %71 = vector.broadcast %70 : vector<1x32xf32> to vector<8x32xf32>
    %72 = arith.mulf %69, %71 : vector<8x32xf32>
    %c0_39 = arith.constant 0 : index
    %c0_40 = arith.constant 0 : index
    %73 = vector.load %arg8[%c0_39, %c0_40] : memref<1x32xf32, #tpu.memory_space<vmem>>, vector<1x32xf32>
    %74 = vector.broadcast %73 : vector<1x32xf32> to vector<8x32xf32>
    %75 = arith.mulf %69, %74 : vector<8x32xf32>
    %cst_41 = arith.constant -0.918938517 : f32
    %76 = vector.broadcast %cst_41 : f32 to vector<8x32xf32>
    %77 = arith.subf %76, %75 : vector<8x32xf32>
    %78 = arith.subf %60, %72 : vector<8x32xf32>
    %79 = arith.mulf %78, %78 : vector<8x32xf32>
    %cst_42 = arith.constant 5.000000e-01 : f32
    %80 = vector.broadcast %cst_42 : f32 to vector<8x32xf32>
    %81 = arith.mulf %80, %79 : vector<8x32xf32>
    %cst_43 = arith.constant -2.000000e+00 : f32
    %82 = vector.broadcast %cst_43 : f32 to vector<8x32xf32>
    %83 = arith.mulf %82, %75 : vector<8x32xf32>
    %84 = math.exp %83 : vector<8x32xf32>
    %85 = arith.mulf %81, %84 : vector<8x32xf32>
    %86 = arith.subf %77, %85 : vector<8x32xf32>
    %cst_44 = arith.constant 0.000000e+00 : f32
    %87 = vector.broadcast %cst_44 : f32 to vector<8x32xf32>
    %88 = tpu.concatenate %60, %86, %65, %87 in 1 : vector<8x32xf32>, vector<8x32xf32>, vector<8x32xf32>, vector<8x32xf32> -> vector<8x128xf32>
    %c0_45 = arith.constant 0 : index
    %c0_46 = arith.constant 0 : index
    %89 = vector.load %arg9[%c0_45, %c0_46] : memref<8x128xf32, #tpu.memory_space<vmem>>, vector<8x128xf32>
    tpu.vector_store %arg9[%c0_45, %c0_46], %88 {strides = array<i32>} : memref<8x128xf32, #tpu.memory_space<vmem>>, vector<8x128xf32>,
    return
  }
  func.func @transform_0(%arg0: i32) -> (i32, i32) {
    %c0_i32 = arith.constant 0 : i32
    %c0_i32_0 = arith.constant 0 : i32
    return %arg0, %c0_i32 : i32, i32
  }
  func.func @transform_1(%arg0: i32) -> (i32, i32, i32) {
    %c0_i32 = arith.constant 0 : i32
    %c0_i32_0 = arith.constant 0 : i32
    %c0_i32_1 = arith.constant 0 : i32
    %c0_i32_2 = arith.constant 0 : i32
    return %c0_i32, %c0_i32_0, %c0_i32_1 : i32, i32, i32
  }
  func.func @transform_2(%arg0: i32) -> (i32, i32) {
    %c0_i32 = arith.constant 0 : i32
    %c0_i32_0 = arith.constant 0 : i32
    %c0_i32_1 = arith.constant 0 : i32
    return %c0_i32, %c0_i32_0 : i32, i32
  }
  func.func @transform_3(%arg0: i32) -> (i32, i32, i32) {
    %c0_i32 = arith.constant 0 : i32
    %c0_i32_0 = arith.constant 0 : i32
    %c0_i32_1 = arith.constant 0 : i32
    %c0_i32_2 = arith.constant 0 : i32
    return %c0_i32, %c0_i32_0, %c0_i32_1 : i32, i32, i32
  }
  func.func @transform_4(%arg0: i32) -> (i32, i32, i32) {
    %c0_i32 = arith.constant 0 : i32
    %c0_i32_0 = arith.constant 0 : i32
    %c0_i32_1 = arith.constant 0 : i32
    %c0_i32_2 = arith.constant 0 : i32
    return %c0_i32, %c0_i32_0, %c0_i32_1 : i32, i32, i32
  }
  func.func @transform_5(%arg0: i32) -> (i32, i32, i32) {
    %c0_i32 = arith.constant 0 : i32
    %c0_i32_0 = arith.constant 0 : i32
    %c0_i32_1 = arith.constant 0 : i32
    %c0_i32_2 = arith.constant 0 : i32
    return %c0_i32, %c0_i32_0, %c0_i32_1 : i32, i32, i32
  }
  func.func @transform_6(%arg0: i32) -> (i32, i32) {
    %c0_i32 = arith.constant 0 : i32
    %c0_i32_0 = arith.constant 0 : i32
    %c0_i32_1 = arith.constant 0 : i32
    return %c0_i32, %c0_i32_0 : i32, i32
  }
  func.func @transform_7(%arg0: i32) -> (i32, i32) {
    %c0_i32 = arith.constant 0 : i32
    %c0_i32_0 = arith.constant 0 : i32
    %c0_i32_1 = arith.constant 0 : i32
    return %c0_i32, %c0_i32_0 : i32, i32
  }
  func.func @transform_8(%arg0: i32) -> (i32, i32) {
    %c0_i32 = arith.constant 0 : i32
    %c0_i32_0 = arith.constant 0 : i32
    return %arg0, %c0_i32 : i32, i32
  }
}

</mosaic_0001>

<llo_original>
// kernel: tpu_custom_call.1
$region0: #{tpu_custom_call.1}
  #allocation0 [shape = 'u32[]', space=smem, size = 0x4, offset = 0x4, fixed_abs, tag = 'smem constant byte address 0x4 - core index']
  #allocation1 [shape = 'u32[144,128]{1,0:T(1,128)}', space=vmem, size = 0x12000, scoped, tag = 'internal scratch']
  %s0 = inlined_call_operand.hbm [shape: f32[8,64], index: 0, kind: input, shape index: {}]
  %s1 = inlined_call_operand.hbm [shape: f32[2,32,64], index: 1, kind: input, shape index: {}]
  %s2 = inlined_call_operand.hbm [shape: f32[32,128], index: 2, kind: input, shape index: {}]
  %s3 = inlined_call_operand.vmem [shape: f32[2,1,64], index: 3, kind: input, shape index: {}]
  %s4 = inlined_call_operand.hbm [shape: f32[2,64,96], index: 4, kind: input, shape index: {}]
  %s5 = inlined_call_operand.vmem [shape: f32[2,1,96], index: 5, kind: input, shape index: {}]
  %s6 = inlined_call_operand.vmem [shape: f32[1,32], index: 6, kind: input, shape index: {}]
  %s7 = inlined_call_operand.vmem [shape: f32[1,32], index: 7, kind: input, shape index: {}]
  %s8 = inlined_call_operand.hbm [shape: f32[8,128], index: 8, kind: output, shape index: {}]
  %s9 = sld [smem:[#allocation0]]
  $region58: #{tpu_custom_call.1} parent=0
    _
  %s11 = ssub.s32 1, %s9
  %s12 = scalar_select 0, %s11, %s9
  $region1: #{tpu_custom_call.1} parent=0
    #allocation2 [shape = 'u8[4096]{0}', space=vmem, size = 0x1000, scoped, tag = 'input window, operand 0, single buffered']
    #allocation3 [shape = 's32[1]{0}', space=sflag, size = 0x4, scoped, tag = 'scoped memory for tpu_custom_call.1']
    #allocation4 [shape = 's32[1]{0}', space=sflag, size = 0x4, scoped, tag = 'scoped memory for tpu_custom_call.1']
    #allocation5 [shape = 'u8[32768]{0}', space=vmem, size = 0x8000, scoped, tag = 'input window, operand 1, single buffered']
    #allocation6 [shape = 's32[1]{0}', space=sflag, size = 0x4, scoped, tag = 'scoped memory for tpu_custom_call.1']
    #allocation7 [shape = 'u8[16384]{0}', space=vmem, size = 0x4000, scoped, tag = 'input window, operand 2, single buffered']
    #allocation8 [shape = 'u8[65536]{0}', space=vmem, size = 0x10000, scoped, tag = 'input window, operand 4, single buffered']
    #allocation9 [shape = 's32[1]{0}', space=sflag, size = 0x4, scoped, tag = 'scoped memory for tpu_custom_call.1']
    #allocation10 [shape = 'u8[4096]{0}', space=vmem, size = 0x1000, scoped, tag = 'output window, operand 0, single buffered']
    %13 = vsyncpa [#allocation3], 0
    %14 = vsyncpa [#allocation6], 0
    %15 = vsyncpa [#allocation9], 0
    %16 = vsyncpa [#allocation4], 0
    // Predicated region
    $region2: #{tpu_custom_call.1} parent=1 // pred_check
      _
    $region3: #{tpu_custom_call.1} parent=1 // pred_check_branch
      %18 = sbr.rel (0) target = $region5
    $region4: #{tpu_custom_call.1} parent=1 // pred_region
      %s20 = ssub.s32 128, 128
      %21 = vsyncadd [#allocation3], %s20
      %s23 = sshll.u32 [#allocation2], 4
      %s24 = int_to_ptr.vmem [resolvable:$true] %s23
      %26 = dma.hbm_to_vmem [thread:$0]  %s0, 128, %s24, [#allocation3]
    $region5: #{tpu_custom_call.1} parent=1 // pred_fallthru
      _
    // Predicated region
    $region6: #{tpu_custom_call.1} parent=1 // pred_check
      _
    $region7: #{tpu_custom_call.1} parent=1 // pred_check_branch
      %28 = sbr.rel (0) target = $region9
    $region8: #{tpu_custom_call.1} parent=1 // pred_region
      %s30 = ssub.s32 1024, 1024
      %31 = vsyncadd [#allocation6], %s30
      %s32 = sshll.u32 [#allocation5], 4
      %s33 = int_to_ptr.vmem [resolvable:$true] %s32
      %38 = dma.hbm_to_vmem [thread:$0]  %s1, 1024, %s33, [#allocation6], 128, 128, 8
    $region9: #{tpu_custom_call.1} parent=1 // pred_fallthru
      _
    // Predicated region
    $region10: #{tpu_custom_call.1} parent=1 // pred_check
      _
    $region11: #{tpu_custom_call.1} parent=1 // pred_check_branch
      %40 = sbr.rel (0) target = $region13
    $region12: #{tpu_custom_call.1} parent=1 // pred_region
      %s42 = ssub.s32 512, 512
      %43 = vsyncadd [#allocation6], %s42
      %s44 = sshll.u32 [#allocation7], 4
      %s45 = int_to_ptr.vmem [resolvable:$true] %s44
      %50 = dma.hbm_to_vmem [thread:$0]  %s2, 512, %s45, [#allocation6], 128, 128, 8
    $region13: #{tpu_custom_call.1} parent=1 // pred_fallthru
      _
    // Predicated region
    $region14: #{tpu_custom_call.1} parent=1 // pred_check
      _
    $region15: #{tpu_custom_call.1} parent=1 // pred_check_branch
      %52 = sbr.rel (0) target = $region17
    $region16: #{tpu_custom_call.1} parent=1 // pred_region
      _
    $region17: #{tpu_custom_call.1} parent=1 // pred_fallthru
      _
    // Predicated region
    $region18: #{tpu_custom_call.1} parent=1 // pred_check
      _
    $region19: #{tpu_custom_call.1} parent=1 // pred_check_branch
      %54 = sbr.rel (0) target = $region21
    $region20: #{tpu_custom_call.1} parent=1 // pred_region
      %s56 = ssub.s32 2048, 2048
      %57 = vsyncadd [#allocation9], %s56
      %s58 = sshll.u32 [#allocation8], 4
      %s59 = int_to_ptr.vmem [resolvable:$true] %s58
      %64 = dma.hbm_to_vmem [thread:$0]  %s4, 2048, %s59, [#allocation9], 128, 128, 8
    $region21: #{tpu_custom_call.1} parent=1 // pred_fallthru
      _
    // Predicated region
    $region22: #{tpu_custom_call.1} parent=1 // pred_check
      _
    $region23: #{tpu_custom_call.1} parent=1 // pred_check_branch
      %66 = sbr.rel (0) target = $region25
    $region24: #{tpu_custom_call.1} parent=1 // pred_region
      _
    $region25: #{tpu_custom_call.1} parent=1 // pred_fallthru
      _
    // Predicated region
    $region26: #{tpu_custom_call.1} parent=1 // pred_check
      _
    $region27: #{tpu_custom_call.1} parent=1 // pred_check_branch
      %68 = sbr.rel (0) target = $region29
    $region28: #{tpu_custom_call.1} parent=1 // pred_region
      _
    $region29: #{tpu_custom_call.1} parent=1 // pred_fallthru
      _
    // Predicated region
    $region30: #{tpu_custom_call.1} parent=1 // pred_check
      _
    $region31: #{tpu_custom_call.1} parent=1 // pred_check_branch
      %70 = sbr.rel (0) target = $region33
    $region32: #{tpu_custom_call.1} parent=1 // pred_region
      _
    $region33: #{tpu_custom_call.1} parent=1 // pred_fallthru
      _
    // Predicated region
    $region34: #{tpu_custom_call.1} parent=1 // pred_check
      _
    $region35: #{tpu_custom_call.1} parent=1 // pred_check_branch
      %72 = sbr.rel (0) target = $region37
    $region36: #{tpu_custom_call.1} parent=1 // pred_region
      %73 = dma.done [#allocation3], 128
    $region37: #{tpu_custom_call.1} parent=1 // pred_fallthru
      _
    // Predicated region
    $region38: #{tpu_custom_call.1} parent=1 // pred_check
      _
    $region39: #{tpu_custom_call.1} parent=1 // pred_check_branch
      %75 = sbr.rel (0) target = $region41
    $region40: #{tpu_custom_call.1} parent=1 // pred_region
      %76 = dma.done [#allocation6], 1024
    $region41: #{tpu_custom_call.1} parent=1 // pred_fallthru
      _
    // Predicated region
    $region42: #{tpu_custom_call.1} parent=1 // pred_check
      _
    $region43: #{tpu_custom_call.1} parent=1 // pred_check_branch
      %78 = sbr.rel (0) target = $region45
    $region44: #{tpu_custom_call.1} parent=1 // pred_region
      %79 = dma.done [#allocation6], 512
    $region45: #{tpu_custom_call.1} parent=1 // pred_fallthru
      _
    // Predicated region
    $region46: #{tpu_custom_call.1} parent=1 // pred_check
      _
    $region47: #{tpu_custom_call.1} parent=1 // pred_check_branch
      %81 = sbr.rel (0) target = $region49
    $region48: #{tpu_custom_call.1} parent=1 // pred_region
      %82 = dma.done [#allocation9], 2048
    $region49: #{tpu_custom_call.1} parent=1 // pred_fallthru
      _
    %v83 = vld [vmem:[#allocation2] sm:$0xff]
    %v84 = vld [vmem:[#allocation7] sm:$0xff]
    %v85 = vld [vmem:[#allocation7 + $0x8] sm:$0xff]
    %v86 = vld [vmem:[#allocation7 + $0x10] sm:$0xff]
    %v87 = vld [vmem:[#allocation7 + $0x18] sm:$0xff]
    %89 = vrot.lane.b32.xlu0 %v83, 96
    %v90 = vpop.permute.xlu0 %89
    %vm91 = vcmask 261120
    %v92 = vsel %vm91, %v90, 0
    %94 = vmatprep.subr.mxu0 0.0
    %95 = vmatpush1.msra.mxu0 %v84
    %96 = vmatprep.subr.mxu0 0.0
    %97 = vmatpush1.msra.mxu0 %v85
    %98 = vmatprep.subr.mxu0 0.0
    %99 = vmatpush1.msra.mxu0 %v86
    %100 = vmatprep.subr.mxu0 0.0
    %101 = vmatpush1.msra.mxu0 %v87
    %102 = vmatprep.subr.mxu0 0.0
    %103 = vmatpush1.msra.mxu0 0.0
    %104 = vmatprep.subr.mxu0 0.0
    %105 = vmatpush1.msra.mxu0 0.0
    %106 = vmatprep.subr.mxu0 0.0
    %107 = vmatpush1.msra.mxu0 0.0
    %108 = vmatprep.subr.mxu0 0.0
    %109 = vmatpush1.msra.mxu0 0.0
    %110 = vmatprep.subr.mxu0 0.0
    %111 = vmatpush1.msra.mxu0 0.0
    %112 = vmatprep.subr.mxu0 0.0
    %113 = vmatpush1.msra.mxu0 0.0
    %114 = vmatprep.subr.mxu0 0.0
    %115 = vmatpush1.msra.mxu0 0.0
    %116 = vmatprep.subr.mxu0 0.0
    %117 = vmatpush1.msra.mxu0 0.0
    %118 = vmatprep.subr.mxu0 0.0
    %119 = vmatpush1.msra.mxu0 0.0
    %120 = vmatprep.subr.mxu0 0.0
    %121 = vmatpush1.msra.mxu0 0.0
    %122 = vmatprep.subr.mxu0 0.0
    %123 = vmatpush1.msra.mxu0 0.0
    %124 = vmatprep.subr.mxu0 0.0
    %125 = vmatpush1.msra.mxu0 0.0
    %126 = vmatprep.subr.mxu0 0.0
    %127 = vmatpush1.msra.mxu0 0.0
    %128 = vmatprep.subr.mxu0 0.0
    %129 = vmatpush1.msra.mxu0 0.0
    %130 = vmatprep.subr.mxu0 0.0
    %131 = vmatpush1.msra.mxu0 0.0
    %132 = vmatprep.subr.mxu0 0.0
    %133 = vmatpush1.msra.mxu0 0.0
    %134 = vmatprep.subr.mxu0 0.0
    %135 = vmatpush1.msra.mxu0 0.0
    %136 = vmatprep.subr.mxu0 0.0
    %137 = vmatpush1.msra.mxu0 0.0
    %138 = vmatprep.subr.mxu0 0.0
    %139 = vmatpush1.msra.mxu0 0.0
    %140 = vmatprep.subr.mxu0 0.0
    %141 = vmatpush1.msra.mxu0 0.0
    %142 = vmatprep.subr.mxu0 0.0
    %143 = vmatpush1.msra.mxu0 0.0
    %144 = vmatprep.subr.mxu0 0.0
    %145 = vmatpush1.msra.mxu0 0.0
    %146 = vmatprep.subr.mxu0 0.0
    %147 = vmatpush1.msra.mxu0 0.0
    %148 = vmatprep.subr.mxu0 0.0
    %149 = vmatpush1.msra.mxu0 0.0
    %150 = vmatprep.subr.mxu0 0.0
    %151 = vmatpush1.msra.mxu0 0.0
    %152 = vmatprep.subr.mxu0 0.0
    %153 = vmatpush1.msra.mxu0 0.0
    %154 = vmatprep.subr.mxu0 0.0
    %155 = vmatpush1.msra.mxu0 0.0
    %156 = vmatprep.subr.mxu0 0.0
    %157 = vmatpush1.msra.mxu0 0.0
    %158 = vmatprep.mubr.f32.mxu0 0.0
    %159 = vmatmul.mubr.f32.gmra.mrb[0].mxu0 %v92
    %v160 = vpop.f32.mrb[0].mxu0
    %v161 = vadd.f32 0.0, %v160
    %v162 = vpop.f32.mrb[0].mxu0
    %163 = vdwg.mxu0
    %v164 = vld [vmem:[#allocation5] sm:$0xff]
    %v165 = vld [vmem:[#allocation5 + $0x8] sm:$0xff]
    %v166 = vld [vmem:[#allocation5 + $0x10] sm:$0xff]
    %v167 = vld [vmem:[#allocation5 + $0x18] sm:$0xff]
    %v168 = vsel %vm91, %v83, 0
    %170 = vmatprep.subr.mxu0 0.0
    %171 = vmatpush1.msra.mxu0 %v164
    %172 = vmatprep.subr.mxu0 0.0
    %173 = vmatpush1.msra.mxu0 %v165
    %174 = vmatprep.subr.mxu0 0.0
    %175 = vmatpush1.msra.mxu0 %v166
    %176 = vmatprep.subr.mxu0 0.0
    %177 = vmatpush1.msra.mxu0 %v167
    %178 = vmatprep.subr.mxu0 0.0
    %179 = vmatpush1.msra.mxu0 0.0
    %180 = vmatprep.subr.mxu0 0.0
    %181 = vmatpush1.msra.mxu0 0.0
    %182 = vmatprep.subr.mxu0 0.0
    %183 = vmatpush1.msra.mxu0 0.0
    %184 = vmatprep.subr.mxu0 0.0
    %185 = vmatpush1.msra.mxu0 0.0
    %186 = vmatprep.subr.mxu0 0.0
    %187 = vmatpush1.msra.mxu0 0.0
    %188 = vmatprep.subr.mxu0 0.0
    %189 = vmatpush1.msra.mxu0 0.0
    %190 = vmatprep.subr.mxu0 0.0
    %191 = vmatpush1.msra.mxu0 0.0
    %192 = vmatprep.subr.mxu0 0.0
    %193 = vmatpush1.msra.mxu0 0.0
    %194 = vmatprep.subr.mxu0 0.0
    %195 = vmatpush1.msra.mxu0 0.0
    %196 = vmatprep.subr.mxu0 0.0
    %197 = vmatpush1.msra.mxu0 0.0
    %198 = vmatprep.subr.mxu0 0.0
    %199 = vmatpush1.msra.mxu0 0.0
    %200 = vmatprep.subr.mxu0 0.0
    %201 = vmatpush1.msra.mxu0 0.0
    %202 = vmatprep.subr.mxu0 0.0
    %203 = vmatpush1.msra.mxu0 0.0
    %204 = vmatprep.subr.mxu0 0.0
    %205 = vmatpush1.msra.mxu0 0.0
    %206 = vmatprep.subr.mxu0 0.0
    %207 = vmatpush1.msra.mxu0 0.0
    %208 = vmatprep.subr.mxu0 0.0
    %209 = vmatpush1.msra.mxu0 0.0
    %210 = vmatprep.subr.mxu0 0.0
    %211 = vmatpush1.msra.mxu0 0.0
    %212 = vmatprep.subr.mxu0 0.0
    %213 = vmatpush1.msra.mxu0 0.0
    %214 = vmatprep.subr.mxu0 0.0
    %215 = vmatpush1.msra.mxu0 0.0
    %216 = vmatprep.subr.mxu0 0.0
    %217 = vmatpush1.msra.mxu0 0.0
    %218 = vmatprep.subr.mxu0 0.0
    %219 = vmatpush1.msra.mxu0 0.0
    %220 = vmatprep.subr.mxu0 0.0
    %221 = vmatpush1.msra.mxu0 0.0
    %222 = vmatprep.subr.mxu0 0.0
    %223 = vmatpush1.msra.mxu0 0.0
    %224 = vmatprep.subr.mxu0 0.0
    %225 = vmatpush1.msra.mxu0 0.0
    %226 = vmatprep.subr.mxu0 0.0
    %227 = vmatpush1.msra.mxu0 0.0
    %228 = vmatprep.subr.mxu0 0.0
    %229 = vmatpush1.msra.mxu0 0.0
    %230 = vmatprep.subr.mxu0 0.0
    %231 = vmatpush1.msra.mxu0 0.0
    %232 = vmatprep.subr.mxu0 0.0
    %233 = vmatpush1.msra.mxu0 0.0
    %234 = vmatprep.mubr.f32.mxu0 0.0
    %235 = vmatmul.mubr.f32.gmra.mrb[0].mxu0 %v168
    %v236 = vpop.f32.mrb[0].mxu0
    %v237 = vadd.f32 %v161, %v236
    %v238 = vpop.f32.mrb[0].mxu0
    %239 = vdwg.mxu0
    %v240 = vld [vmem:[%s3] sm:$0x1]
    %v242 = vlaneseq
    %v243 = vshrl.u32 %v242, 7
    %v244 = vsub.s32 0, %v243
    %v245 = vrot.slane %v240, %v244
    %v247 = vadd.f32 %v237, %v245
    %v248 = vtanh.pop %v247
    %v249 = vld [vmem:[#allocation8] sm:$0xff]
    %v250 = vld [vmem:[#allocation8 + $0x8] sm:$0xff]
    %v251 = vld [vmem:[#allocation8 + $0x10] sm:$0xff]
    %v252 = vld [vmem:[#allocation8 + $0x18] sm:$0xff]
    %v253 = vld [vmem:[#allocation8 + $0x20] sm:$0xff]
    %v254 = vld [vmem:[#allocation8 + $0x28] sm:$0xff]
    %v255 = vld [vmem:[#allocation8 + $0x30] sm:$0xff]
    %v256 = vld [vmem:[#allocation8 + $0x38] sm:$0xff]
    %v257 = vld [vmem:[%s5] sm:$0x1]
    %v259 = vlaneseq
    %v260 = vshrl.u32 %v259, 7
    %v261 = vsub.s32 0, %v260
    %v262 = vrot.slane %v257, %v261
    %vm264 = vcmask 523264
    %v266 = vsel %vm264, %v248, 0
    %268 = vmatprep.subr.mxu0 0.0
    %269 = vmatpush1.msra.mxu0 %v249
    %270 = vmatprep.subr.mxu0 0.0
    %271 = vmatpush1.msra.mxu0 %v250
    %272 = vmatprep.subr.mxu0 0.0
    %273 = vmatpush1.msra.mxu0 %v251
    %274 = vmatprep.subr.mxu0 0.0
    %275 = vmatpush1.msra.mxu0 %v252
    %276 = vmatprep.subr.mxu0 0.0
    %277 = vmatpush1.msra.mxu0 %v253
    %278 = vmatprep.subr.mxu0 0.0
    %279 = vmatpush1.msra.mxu0 %v254
    %280 = vmatprep.subr.mxu0 0.0
    %281 = vmatpush1.msra.mxu0 %v255
    %282 = vmatprep.subr.mxu0 0.0
    %283 = vmatpush1.msra.mxu0 %v256
    %284 = vmatprep.subr.mxu0 0.0
    %285 = vmatpush1.msra.mxu0 0.0
    %286 = vmatprep.subr.mxu0 0.0
    %287 = vmatpush1.msra.mxu0 0.0
    %288 = vmatprep.subr.mxu0 0.0
    %289 = vmatpush1.msra.mxu0 0.0
    %290 = vmatprep.subr.mxu0 0.0
    %291 = vmatpush1.msra.mxu0 0.0
    %292 = vmatprep.subr.mxu0 0.0
    %293 = vmatpush1.msra.mxu0 0.0
    %294 = vmatprep.subr.mxu0 0.0
    %295 = vmatpush1.msra.mxu0 0.0
    %296 = vmatprep.subr.mxu0 0.0
    %297 = vmatpush1.msra.mxu0 0.0
    %298 = vmatprep.subr.mxu0 0.0
    %299 = vmatpush1.msra.mxu0 0.0
    %300 = vmatprep.subr.mxu0 0.0
    %301 = vmatpush1.msra.mxu0 0.0
    %302 = vmatprep.subr.mxu0 0.0
    %303 = vmatpush1.msra.mxu0 0.0
    %304 = vmatprep.subr.mxu0 0.0
    %305 = vmatpush1.msra.mxu0 0.0
    %306 = vmatprep.subr.mxu0 0.0
    %307 = vmatpush1.msra.mxu0 0.0
    %308 = vmatprep.subr.mxu0 0.0
    %309 = vmatpush1.msra.mxu0 0.0
    %310 = vmatprep.subr.mxu0 0.0
    %311 = vmatpush1.msra.mxu0 0.0
    %312 = vmatprep.subr.mxu0 0.0
    %313 = vmatpush1.msra.mxu0 0.0
    %314 = vmatprep.subr.mxu0 0.0
    %315 = vmatpush1.msra.mxu0 0.0
    %316 = vmatprep.subr.mxu0 0.0
    %317 = vmatpush1.msra.mxu0 0.0
    %318 = vmatprep.subr.mxu0 0.0
    %319 = vmatpush1.msra.mxu0 0.0
    %320 = vmatprep.subr.mxu0 0.0
    %321 = vmatpush1.msra.mxu0 0.0
    %322 = vmatprep.subr.mxu0 0.0
    %323 = vmatpush1.msra.mxu0 0.0
    %324 = vmatprep.subr.mxu0 0.0
    %325 = vmatpush1.msra.mxu0 0.0
    %326 = vmatprep.subr.mxu0 0.0
    %327 = vmatpush1.msra.mxu0 0.0
    %328 = vmatprep.subr.mxu0 0.0
    %329 = vmatpush1.msra.mxu0 0.0
    %330 = vmatprep.subr.mxu0 0.0
    %331 = vmatpush1.msra.mxu0 0.0
    %332 = vmatprep.mubr.f32.mxu0 0.0
    %333 = vmatmul.mubr.f32.gmra.mrb[0].mxu0 %v266
    %v334 = vpop.f32.mrb[0].mxu0
    %v335 = vadd.f32 %v262, %v334
    %v336 = vpop.f32.mrb[0].mxu0
    %337 = vdwg.mxu0
    %v338 = vtanh.pop %v335
    %v339 = vadd.f32 %v338, -0.6931472
    %v340 = vsub.f32 %v83, %v335
    %v341 = vsub.f32 0.0, %v339
    %v342 = vmul.f32 %v341, 1.442695
    %v343 = vpow.pop %v342
    %345 = vrot.lane.b32.xlu0 %v343, 96
    %v346 = vpop.permute.xlu0 %345
    %v348 = vmul.f32 %v340, %v346
    %s349 = scalar_lea.vmem [#allocation5], 32
    %v350 = vld [vmem:[%s349] sm:$0xff]
    %v351 = vld [vmem:[%s349 + $0x8] sm:$0xff]
    %v352 = vld [vmem:[%s349 + $0x10] sm:$0xff]
    %v353 = vld [vmem:[%s349 + $0x18] sm:$0xff]
    %355 = vrot.lane.b32.xlu0 %v161, 64
    %v356 = vpop.permute.xlu0 %355
    %v359 = vsel %vm91, %v348, 0
    %361 = vmatprep.subr.mxu0 0.0
    %362 = vmatpush1.msra.mxu0 %v350
    %363 = vmatprep.subr.mxu0 0.0
    %364 = vmatpush1.msra.mxu0 %v351
    %365 = vmatprep.subr.mxu0 0.0
    %366 = vmatpush1.msra.mxu0 %v352
    %367 = vmatprep.subr.mxu0 0.0
    %368 = vmatpush1.msra.mxu0 %v353
    %369 = vmatprep.subr.mxu0 0.0
    %370 = vmatpush1.msra.mxu0 0.0
    %371 = vmatprep.subr.mxu0 0.0
    %372 = vmatpush1.msra.mxu0 0.0
    %373 = vmatprep.subr.mxu0 0.0
    %374 = vmatpush1.msra.mxu0 0.0
    %375 = vmatprep.subr.mxu0 0.0
    %376 = vmatpush1.msra.mxu0 0.0
    %377 = vmatprep.subr.mxu0 0.0
    %378 = vmatpush1.msra.mxu0 0.0
    %379 = vmatprep.subr.mxu0 0.0
    %380 = vmatpush1.msra.mxu0 0.0
    %381 = vmatprep.subr.mxu0 0.0
    %382 = vmatpush1.msra.mxu0 0.0
    %383 = vmatprep.subr.mxu0 0.0
    %384 = vmatpush1.msra.mxu0 0.0
    %385 = vmatprep.subr.mxu0 0.0
    %386 = vmatpush1.msra.mxu0 0.0
    %387 = vmatprep.subr.mxu0 0.0
    %388 = vmatpush1.msra.mxu0 0.0
    %389 = vmatprep.subr.mxu0 0.0
    %390 = vmatpush1.msra.mxu0 0.0
    %391 = vmatprep.subr.mxu0 0.0
    %392 = vmatpush1.msra.mxu0 0.0
    %393 = vmatprep.subr.mxu0 0.0
    %394 = vmatpush1.msra.mxu0 0.0
    %395 = vmatprep.subr.mxu0 0.0
    %396 = vmatpush1.msra.mxu0 0.0
    %397 = vmatprep.subr.mxu0 0.0
    %398 = vmatpush1.msra.mxu0 0.0
    %399 = vmatprep.subr.mxu0 0.0
    %400 = vmatpush1.msra.mxu0 0.0
    %401 = vmatprep.subr.mxu0 0.0
    %402 = vmatpush1.msra.mxu0 0.0
    %403 = vmatprep.subr.mxu0 0.0
    %404 = vmatpush1.msra.mxu0 0.0
    %405 = vmatprep.subr.mxu0 0.0
    %406 = vmatpush1.msra.mxu0 0.0
    %407 = vmatprep.subr.mxu0 0.0
    %408 = vmatpush1.msra.mxu0 0.0
    %409 = vmatprep.subr.mxu0 0.0
    %410 = vmatpush1.msra.mxu0 0.0
    %411 = vmatprep.subr.mxu0 0.0
    %412 = vmatpush1.msra.mxu0 0.0
    %413 = vmatprep.subr.mxu0 0.0
    %414 = vmatpush1.msra.mxu0 0.0
    %415 = vmatprep.subr.mxu0 0.0
    %416 = vmatpush1.msra.mxu0 0.0
    %417 = vmatprep.subr.mxu0 0.0
    %418 = vmatpush1.msra.mxu0 0.0
    %419 = vmatprep.subr.mxu0 0.0
    %420 = vmatpush1.msra.mxu0 0.0
    %421 = vmatprep.subr.mxu0 0.0
    %422 = vmatpush1.msra.mxu0 0.0
    %423 = vmatprep.subr.mxu0 0.0
    %424 = vmatpush1.msra.mxu0 0.0
    %425 = vmatprep.mubr.f32.mxu0 0.0
    %426 = vmatmul.mubr.f32.gmra.mrb[0].mxu0 %v359
    %v427 = vpop.f32.mrb[0].mxu0
    %v428 = vadd.f32 %v356, %v427
    %v429 = vpop.f32.mrb[0].mxu0
    %430 = vdwg.mxu0
    %s431 = scalar_lea.vmem %s3, 1
    %v432 = vld [vmem:[%s431] sm:$0x1]
    %v434 = vlaneseq
    %v435 = vshrl.u32 %v434, 7
    %v436 = vsub.s32 0, %v435
    %v437 = vrot.slane %v432, %v436
    %v439 = vadd.f32 %v428, %v437
    %v440 = vtanh.pop %v439
    %s441 = scalar_lea.vmem [#allocation8], 64
    %v442 = vld [vmem:[%s441] sm:$0xff]
    %v443 = vld [vmem:[%s441 + $0x8] sm:$0xff]
    %v444 = vld [vmem:[%s441 + $0x10] sm:$0xff]
    %v445 = vld [vmem:[%s441 + $0x18] sm:$0xff]
    %v446 = vld [vmem:[%s441 + $0x20] sm:$0xff]
    %v447 = vld [vmem:[%s441 + $0x28] sm:$0xff]
    %v448 = vld [vmem:[%s441 + $0x30] sm:$0xff]
    %v449 = vld [vmem:[%s441 + $0x38] sm:$0xff]
    %s450 = scalar_lea.vmem %s5, 1
    %v451 = vld [vmem:[%s450] sm:$0x1]
    %v453 = vlaneseq
    %v454 = vshrl.u32 %v453, 7
    %v455 = vsub.s32 0, %v454
    %v456 = vrot.slane %v451, %v455
    %v459 = vsel %vm264, %v440, 0
    %461 = vmatprep.subr.mxu0 0.0
    %462 = vmatpush1.msra.mxu0 %v442
    %463 = vmatprep.subr.mxu0 0.0
    %464 = vmatpush1.msra.mxu0 %v443
    %465 = vmatprep.subr.mxu0 0.0
    %466 = vmatpush1.msra.mxu0 %v444
    %467 = vmatprep.subr.mxu0 0.0
    %468 = vmatpush1.msra.mxu0 %v445
    %469 = vmatprep.subr.mxu0 0.0
    %470 = vmatpush1.msra.mxu0 %v446
    %471 = vmatprep.subr.mxu0 0.0
    %472 = vmatpush1.msra.mxu0 %v447
    %473 = vmatprep.subr.mxu0 0.0
    %474 = vmatpush1.msra.mxu0 %v448
    %475 = vmatprep.subr.mxu0 0.0
    %476 = vmatpush1.msra.mxu0 %v449
    %477 = vmatprep.subr.mxu0 0.0
    %478 = vmatpush1.msra.mxu0 0.0
    %479 = vmatprep.subr.mxu0 0.0
    %480 = vmatpush1.msra.mxu0 0.0
    %481 = vmatprep.subr.mxu0 0.0
    %482 = vmatpush1.msra.mxu0 0.0
    %483 = vmatprep.subr.mxu0 0.0
    %484 = vmatpush1.msra.mxu0 0.0
    %485 = vmatprep.subr.mxu0 0.0
    %486 = vmatpush1.msra.mxu0 0.0
    %487 = vmatprep.subr.mxu0 0.0
    %488 = vmatpush1.msra.mxu0 0.0
    %489 = vmatprep.subr.mxu0 0.0
    %490 = vmatpush1.msra.mxu0 0.0
    %491 = vmatprep.subr.mxu0 0.0
    %492 = vmatpush1.msra.mxu0 0.0
    %493 = vmatprep.subr.mxu0 0.0
    %494 = vmatpush1.msra.mxu0 0.0
    %495 = vmatprep.subr.mxu0 0.0
    %496 = vmatpush1.msra.mxu0 0.0
    %497 = vmatprep.subr.mxu0 0.0
    %498 = vmatpush1.msra.mxu0 0.0
    %499 = vmatprep.subr.mxu0 0.0
    %500 = vmatpush1.msra.mxu0 0.0
    %501 = vmatprep.subr.mxu0 0.0
    %502 = vmatpush1.msra.mxu0 0.0
    %503 = vmatprep.subr.mxu0 0.0
    %504 = vmatpush1.msra.mxu0 0.0
    %505 = vmatprep.subr.mxu0 0.0
    %506 = vmatpush1.msra.mxu0 0.0
    %507 = vmatprep.subr.mxu0 0.0
    %508 = vmatpush1.msra.mxu0 0.0
    %509 = vmatprep.subr.mxu0 0.0
    %510 = vmatpush1.msra.mxu0 0.0
    %511 = vmatprep.subr.mxu0 0.0
    %512 = vmatpush1.msra.mxu0 0.0
    %513 = vmatprep.subr.mxu0 0.0
    %514 = vmatpush1.msra.mxu0 0.0
    %515 = vmatprep.subr.mxu0 0.0
    %516 = vmatpush1.msra.mxu0 0.0
    %517 = vmatprep.subr.mxu0 0.0
    %518 = vmatpush1.msra.mxu0 0.0
    %519 = vmatprep.subr.mxu0 0.0
    %520 = vmatpush1.msra.mxu0 0.0
    %521 = vmatprep.subr.mxu0 0.0
    %522 = vmatpush1.msra.mxu0 0.0
    %523 = vmatprep.subr.mxu0 0.0
    %524 = vmatpush1.msra.mxu0 0.0
    %525 = vmatprep.mubr.f32.mxu0 0.0
    %526 = vmatmul.mubr.f32.gmra.mrb[0].mxu0 %v459
    %v527 = vpop.f32.mrb[0].mxu0
    %v528 = vadd.f32 %v456, %v527
    %v529 = vpop.f32.mrb[0].mxu0
    %530 = vdwg.mxu0
    %v531 = vtanh.pop %v528
    %v532 = vadd.f32 %v531, -0.6931472
    %v533 = vsub.f32 %v348, %v528
    %v534 = vsub.f32 0.0, %v532
    %v535 = vmul.f32 %v534, 1.442695
    %v536 = vpow.pop %v535
    %538 = vrot.lane.b32.xlu0 %v536, 96
    %v539 = vpop.permute.xlu0 %538
    %v541 = vmul.f32 %v533, %v539
    %543 = vrot.lane.b32.xlu0 %v532, 96
    %v544 = vpop.permute.xlu0 %543
    %v546 = vsub.f32 %v341, %v544
    %vm547 = vcmp.gt.f32.partialorder %v83, 0.0
    %v548 = vsel %vm547, 1, 0
    %v549 = vcvt.s32.f32 %v548
    %v550 = vld [vmem:[%s6] sm:$0x1]
    %v552 = vlaneseq
    %v553 = vshrl.u32 %v552, 7
    %v554 = vsub.s32 0, %v553
    %v555 = vrot.slane %v550, %v554
    %556 = vrot.lane.b32.xlu0 %v555, 32
    %v557 = vpop.permute.xlu0 %556
    %v559 = vmul.f32 %v549, %v557
    %v560 = vld [vmem:[%s7] sm:$0x1]
    %v562 = vlaneseq
    %v563 = vshrl.u32 %v562, 7
    %v564 = vsub.s32 0, %v563
    %v565 = vrot.slane %v560, %v564
    %566 = vrot.lane.b32.xlu0 %v565, 32
    %v567 = vpop.permute.xlu0 %566
    %v569 = vmul.f32 %v549, %v567
    %v570 = vsub.f32 -0.9189385, %v569
    %572 = vrot.lane.b32.xlu0 %v559, 96
    %v573 = vpop.permute.xlu0 %572
    %v575 = vsub.f32 %v541, %v573
    %v576 = vmul.f32 %v575, %v575
    %v577 = vmul.f32 %v576, 0.5
    %v578 = vmul.f32 %v569, -2.0
    %v579 = vmul.f32 %v578, 1.442695
    %v580 = vpow.pop %v579
    %582 = vrot.lane.b32.xlu0 %v580, 96
    %v583 = vpop.permute.xlu0 %582
    %v585 = vmul.f32 %v577, %v583
    %587 = vrot.lane.b32.xlu0 %v585, 32
    %v588 = vpop.permute.xlu0 %587
    %v590 = vsub.f32 %v570, %v588
    %592 = vrot.lane.b32.xlu0 %v546, 32
    %v593 = vpop.permute.xlu0 %592
    %v595 = vsel %vm91, %v541, %v590
    %v596 = vsel %vm264, %v595, %v593
    %vm597 = vcmask 785408
    %v598 = vsel %vm597, %v596, 0.0
    %599 = vst [vmem:[#allocation10] sm:$0xff] %v598
    // Predicated region
    $region50: #{tpu_custom_call.1} parent=1 // pred_check
      _
    $region51: #{tpu_custom_call.1} parent=1 // pred_check_branch
      %601 = sbr.rel (0) target = $region53
    $region52: #{tpu_custom_call.1} parent=1 // pred_region
      %s603 = ssub.s32 128, 128
      %604 = vsyncadd [#allocation4], %s603
      %s606 = sshll.u32 [#allocation10], 4
      %s607 = int_to_ptr.vmem [resolvable:$true] %s606
      %609 = dma.vmem_to_hbm [thread:$0]  %s607, 128, %s8, [#allocation4]
    $region53: #{tpu_custom_call.1} parent=1 // pred_fallthru
      _
    // Predicated region
    $region54: #{tpu_custom_call.1} parent=1 // pred_check
      _
    $region55: #{tpu_custom_call.1} parent=1 // pred_check_branch
      %611 = sbr.rel (0) target = $region57
    $region56: #{tpu_custom_call.1} parent=1 // pred_region
      %612 = dma.done [#allocation4], 128
    $region57: #{tpu_custom_call.1} parent=1 // pred_fallthru
      _
    %613 = vsyncpa [#allocation3], 1
    %614 = vsyncpa [#allocation6], 1
    %615 = vsyncpa [#allocation9], 1
    %616 = vsyncpa [#allocation4], 1

</llo_original>
